<compile_context>
chip_gen: v6e
topology: v6e:2x2x1
jax: 0.10.0
libtpu: 0.0.40
codegen_flags: <defaults>
</compile_context>

<pallas_src>
import functools

import jax
import jax.numpy as jnp
from jax.experimental import pallas as pl
from jax.experimental.pallas import tpu as pltpu


LAYERS_SIZE = [4, 64, 128, 512]
BN_EPS = 1e-5


def _pointnet_kernel(x_ref, w1_ref, b1_ref, w2_ref, b2_ref, w3_ref, b3_ref,
                     o_ref, acc_ref):
    """One grid step = TB batch elements x NC points (M = TB*NC rows).

    x_ref  : (M, C0)      f32   flattened points
    w1_ref : (C0, C1)     f32   (BN folded; used on the VPU)
    w2_ref : (C1, C2)     bf16  (BN folded)
    w3_ref : (C2, C3)     bf16  (BN folded)
    bK_ref : (1, C_k)     f32
    o_ref  : (1, TB, C3)  f32   (resident across the point-chunk axis)
    acc_ref: (TB, C3)     f32   running max over point chunks
    """
    j = pl.program_id(1)

    @pl.when(j == 0)
    def _():
        acc_ref[...] = jnp.full_like(acc_ref, -jnp.inf)

    M, C0 = x_ref.shape
    _, TB, C3 = o_ref.shape
    NC = M // TB

    x = x_ref[...]                                     # (M, C0) f32
    w1 = w1_ref[...]                                   # (C0, C1) f32

    # ---- Layer 1: Conv1d(k=1)+BN+ReLU, K=C0=4 -> 4 VPU broadcast FMAs (f32).
    h = x[:, 0:1] * w1[0:1, :]
    for k in range(1, C0):
        h = h + x[:, k:k + 1] * w1[k:k + 1, :]
    h = jnp.maximum(h + b1_ref[...], 0.0).astype(jnp.bfloat16)      # (M, C1)

    # ---- Layer 2: Conv1d(k=1)+BN+ReLU on the MXU (bf16 in, f32 accumulate).
    h = jnp.dot(h, w2_ref[...], preferred_element_type=jnp.float32)
    h = jnp.maximum(h + b2_ref[...], 0.0).astype(jnp.bfloat16)      # (M, C2)

    # ---- Layer 3: Conv1d(k=1)+BN on the MXU; bias deferred past the max.
    h = jnp.dot(h, w3_ref[...], preferred_element_type=jnp.float32)  # (M, C3)

    # ---- Running max over this chunk's points, per batch element.
    chunk_max = jnp.max(h.reshape(TB, NC, C3), axis=1)               # (TB, C3)
    acc_ref[...] = jnp.maximum(acc_ref[...], chunk_max)

    @pl.when(j == pl.num_programs(1) - 1)
    def _():
        # max_n(h + b) == max_n(h) + b for a per-channel bias.
        o_ref[...] = (acc_ref[...] + b3_ref[...]).reshape(1, TB, C3)


@functools.partial(jax.jit, static_argnames=("target_rows",))
def pointnet_cmap_encoder(x, params, target_rows=2048):
    """x: (B, N, C_in) float32, params: list of BN-folded (w, b) per layer."""
    B, N, C0 = x.shape
    (w1, b1), (w2, b2), (w3, b3) = params
    C3 = w3.shape[1]

    # ---- Tile selection: M = TB * NC rows per grid step (~target_rows).
    N8 = -(-N // 8) * 8                      # f32 sublane alignment for N
    if N8 >= target_rows:
        # Large point counts: one batch element per step, chunk over points
        # with a running-max accumulator (bounds VMEM for any N).
        TB = 1
        n_chunks = -(-N8 // target_rows)
        NC = -(-(-(-N // n_chunks)) // 8) * 8           # ceil, multiple of 8
        B_pad = B
    else:
        # Small/medium point counts: pack TB batch elements per step.
        n_chunks = 1
        NC = N8
        TB = max(1, target_rows // N8)
        if TB >= B:
            TB = max(1, B // 2)              # keep >=2 grid steps (v7x megacore)
        B_pad = -(-B // TB) * TB
    N_total = n_chunks * NC
    M = TB * NC
    B_blocks = B_pad // TB

    # ---- Pad (wrapper-side, cheap XLA ops). Point padding replicates the
    # last point (max-invariant); batch padding adds zero rows sliced off below.
    x = x.astype(jnp.float32)
    if N_total != N:
        pad_pts = jnp.broadcast_to(x[:, N - 1:N, :], (B, N_total - N, C0))
        x = jnp.concatenate([x, pad_pts], axis=1)
    if B_pad != B:
        x = jnp.concatenate(
            [x, jnp.zeros((B_pad - B, N_total, C0), jnp.float32)], axis=0)
    x_flat = x.reshape(B_pad * N_total, C0)            # contiguous -> free

    # x stays f32 (layer 1 is VPU/f32); MXU-facing weights are bf16.
    w1_f = w1.astype(jnp.float32)
    b1_f = b1.astype(jnp.float32)
    w2_b = w2.astype(jnp.bfloat16)
    b2_f = b2.astype(jnp.float32)
    w3_b = w3.astype(jnp.bfloat16)
    b3_f = b3.astype(jnp.float32)

    grid = (B_blocks, n_chunks)

    in_specs = [
        # Works for both regimes: either n_chunks == 1 or TB == 1.
        pl.BlockSpec((M, C0), lambda bb, j, nc=n_chunks: (bb * nc + j, 0)),
        pl.BlockSpec(w1_f.shape, lambda bb, j: (0, 0)),
        pl.BlockSpec(b1_f.shape, lambda bb, j: (0, 0)),
        pl.BlockSpec(w2_b.shape, lambda bb, j: (0, 0)),
        pl.BlockSpec(b2_f.shape, lambda bb, j: (0, 0)),
        pl.BlockSpec(w3_b.shape, lambda bb, j: (0, 0)),
        pl.BlockSpec(b3_f.shape, lambda bb, j: (0, 0)),
    ]
    out_spec = pl.BlockSpec((1, TB, C3), lambda bb, j: (bb, 0, 0))

    out = pl.pallas_call(
        _pointnet_kernel,
        out_shape=jax.ShapeDtypeStruct((B_blocks, TB, C3), jnp.float32),
        grid_spec=pltpu.PrefetchScalarGridSpec(
            num_scalar_prefetch=0,
            grid=grid,
            in_specs=in_specs,
            out_specs=out_spec,
            scratch_shapes=[pltpu.VMEM((TB, C3), jnp.float32)],
        ),
        compiler_params=pltpu.CompilerParams(
            dimension_semantics=("parallel", "arbitrary"),
            vmem_limit_bytes=32 * 1024 * 1024),
    )(x_flat, w1_f, b1_f, w2_b, b2_f, w3_b, b3_f)

    return out.reshape(B_pad, C3)[:B]


def init_params(key, layers_size=LAYERS_SIZE):
    """Deterministic parameter init matching the module's shapes.

    Conv1d(C_in, C_out, 1): weight (C_out, C_in, 1) -- xavier_normal_
                            bias   (C_out,)         -- default uniform
    BatchNorm1d(C_out):     gamma, beta, running_mean, running_var
    Returns BN-folded (w_t, b) pairs ready for the kernel (w_t: (C_in, C_out)).
    """
    params = []
    for i in range(len(layers_size) - 1):
        c_in, c_out = layers_size[i], layers_size[i + 1]
        key, kw, kb, kg, kbeta, kmu, kvar = jax.random.split(key, 7)

        # xavier normal: std = sqrt(2 / (fan_in + fan_out)).
        std = (2.0 / (c_in + c_out)) ** 0.5
        w = jax.random.normal(kw, (c_out, c_in), jnp.float32) * std
        # conv bias default: U(-1/sqrt(fan_in), 1/sqrt(fan_in))
        bound = 1.0 / (c_in ** 0.5)
        b = jax.random.uniform(kb, (c_out,), jnp.float32, -bound, bound)

        # BN params (eval mode). Non-trivial values so the fold is exercised.
        gamma = 1.0 + 0.1 * jax.random.normal(kg, (c_out,), jnp.float32)
        beta = 0.1 * jax.random.normal(kbeta, (c_out,), jnp.float32)
        running_mean = 0.1 * jax.random.normal(kmu, (c_out,), jnp.float32)
        running_var = 1.0 + 0.1 * jax.random.uniform(kvar, (c_out,), jnp.float32)

        # Fold BN into the 1x1 conv: y_bn = scale * (x @ W^T + b) + shift
        scale = gamma / jnp.sqrt(running_var + BN_EPS)
        shift = beta - scale * running_mean
        w_t = w.T * scale[None, :]            # (C_in, C_out)
        b_f = (b * scale + shift)[None, :]    # (1, C_out)
        params.append((w_t, b_f))
    return params


def reference_forward(x, params):
    """Pure-JAX f32 reference of the (BN-folded) forward pass."""
    (w1, b1), (w2, b2), (w3, b3) = params
    h = jnp.maximum(jnp.einsum("bnc,cd->bnd", x, w1) + b1, 0.0)
    h = jnp.maximum(jnp.einsum("bnc,cd->bnd", h, w2) + b2, 0.0)
    h = jnp.einsum("bnc,cd->bnd", h, w3) + b3
    return jnp.max(h, axis=1)


if __name__ == "__main__":
    key = jax.random.PRNGKey(0)
    k_x, k_p = jax.random.split(key)
    params = init_params(k_p)

    # Primary small-shape check (module's layers_size[0] = 4 input channels).
    B, N, C_in = 2, 16, LAYERS_SIZE[0]
    x = jax.random.normal(k_x, (B, N, C_in), jnp.float32)
    out = jax.block_until_ready(pointnet_cmap_encoder(x, params))
    ref = reference_forward(x, params)
    assert out.shape == (B, LAYERS_SIZE[-1]), out.shape
    # bf16 MXU activations with f32 accumulation -> loosened tolerance.
    assert jnp.allclose(out, ref, atol=3e-2, rtol=3e-2), "mismatch (basic)"

    # Exercise (a) TB > 1 with batch padding and (b) the N-chunked
    # running-max accumulator path, at tiny shapes via a small target_rows.
    for (b2, n2, tr) in [(5, 24, 64), (3, 50, 16)]:
        k_x, sub = jax.random.split(k_x)
        x2 = jax.random.normal(sub, (b2, n2, C_in), jnp.float32)
        o2 = jax.block_until_ready(
            pointnet_cmap_encoder(x2, params, target_rows=tr))
        r2 = reference_forward(x2, params)
        assert o2.shape == (b2, LAYERS_SIZE[-1]), o2.shape
        assert jnp.allclose(o2, r2, atol=3e-2, rtol=3e-2), \
            f"mismatch (B={b2}, N={n2}, target_rows={tr})"

    print("KERNEL_OK")
</pallas_src>

<mosaic_0001>
module attributes {stable_mosaic.version = 11 : i64} {
  func.func @_pointnet_kernel(%arg0: i32, %arg1: i32, %arg2: memref<16x4xf32, #tpu.memory_space<vmem>>, %arg3: memref<4x64xf32, #tpu.memory_space<vmem>>, %arg4: memref<1x64xf32, #tpu.memory_space<vmem>>, %arg5: memref<64x128xbf16, #tpu.memory_space<vmem>>, %arg6: memref<1x128xf32, #tpu.memory_space<vmem>>, %arg7: memref<128x512xbf16, #tpu.memory_space<vmem>>, %arg8: memref<1x512xf32, #tpu.memory_space<vmem>>, %arg9: memref<1x1x512xf32, #tpu.memory_space<vmem>>, %arg10: memref<1x512xf32, #tpu.memory_space<vmem>>) attributes {dimension_semantics = [#tpu.dimension_semantics<parallel>, #tpu.dimension_semantics<arbitrary>], iteration_bounds = array<i64: 2, 1>, scalar_prefetch = 0 : i64, scratch_operands = 1 : i64, tpu.core_type = #tpu.core_type<tc>, window_params = [{transform_indices = @transform_0, window_bounds = array<i64: 16, 4>}, {pipeline_mode = #tpu.pipeline_mode<synchronous>, transform_indices = @transform_1, window_bounds = array<i64: 4, 64>}, {pipeline_mode = #tpu.pipeline_mode<synchronous>, transform_indices = @transform_2, window_bounds = array<i64: 1, 64>}, {pipeline_mode = #tpu.pipeline_mode<synchronous>, transform_indices = @transform_3, window_bounds = array<i64: 64, 128>}, {pipeline_mode = #tpu.pipeline_mode<synchronous>, transform_indices = @transform_4, window_bounds = array<i64: 1, 128>}, {pipeline_mode = #tpu.pipeline_mode<synchronous>, transform_indices = @transform_5, window_bounds = array<i64: 128, 512>}, {pipeline_mode = #tpu.pipeline_mode<synchronous>, transform_indices = @transform_6, window_bounds = array<i64: 1, 512>}, {transform_indices = @transform_7, window_bounds = array<i64: 1, 1, 512>}]} {
    %c0_i32 = arith.constant 0 : i32
    %0 = arith.cmpi eq, %arg1, %c0_i32 : i32
    %1 = arith.extui %0 : i1 to i32
    %c0_i32_0 = arith.constant 0 : i32
    %2 = arith.cmpi ne, %1, %c0_i32_0 : i32
    scf.if %2 {
      %cst_22 = arith.constant 0xFF800000 : f32
      %52 = vector.broadcast %cst_22 : f32 to vector<1x512xf32>
      %c0_23 = arith.constant 0 : index
      %c0_24 = arith.constant 0 : index
      %53 = vector.load %arg10[%c0_23, %c0_24] : memref<1x512xf32, #tpu.memory_space<vmem>>, vector<1x512xf32>
      tpu.vector_store %arg10[%c0_23, %c0_24], %52 {strides = array<i32>} : memref<1x512xf32, #tpu.memory_space<vmem>>, vector<1x512xf32>,
    } else {
    }
    %c0 = arith.constant 0 : index
    %c0_1 = arith.constant 0 : index
    %3 = vector.load %arg2[%c0, %c0_1] : memref<16x4xf32, #tpu.memory_space<vmem>>, vector<16x4xf32>
    %c0_2 = arith.constant 0 : index
    %c0_3 = arith.constant 0 : index
    %4 = vector.load %arg3[%c0_2, %c0_3] : memref<4x64xf32, #tpu.memory_space<vmem>>, vector<4x64xf32>
    %5 = vector.extract_strided_slice %3 {offsets = [0, 0], sizes = [16, 1], strides = [1, 1]} : vector<16x4xf32> to vector<16x1xf32>
    %6 = vector.extract_strided_slice %4 {offsets = [0, 0], sizes = [1, 64], strides = [1, 1]} : vector<4x64xf32> to vector<1x64xf32>
    %7 = vector.broadcast %5 : vector<16x1xf32> to vector<16x64xf32>
    %8 = vector.broadcast %6 : vector<1x64xf32> to vector<16x64xf32>
    %9 = arith.mulf %7, %8 : vector<16x64xf32>
    %10 = vector.extract_strided_slice %3 {offsets = [0, 1], sizes = [16, 1], strides = [1, 1]} : vector<16x4xf32> to vector<16x1xf32>
    %11 = vector.extract_strided_slice %4 {offsets = [1, 0], sizes = [1, 64], strides = [1, 1]} : vector<4x64xf32> to vector<1x64xf32>
    %12 = vector.broadcast %10 : vector<16x1xf32> to vector<16x64xf32>
    %13 = vector.broadcast %11 : vector<1x64xf32> to vector<16x64xf32>
    %14 = arith.mulf %12, %13 : vector<16x64xf32>
    %15 = arith.addf %9, %14 : vector<16x64xf32>
    %16 = vector.extract_strided_slice %3 {offsets = [0, 2], sizes = [16, 1], strides = [1, 1]} : vector<16x4xf32> to vector<16x1xf32>
    %17 = vector.extract_strided_slice %4 {offsets = [2, 0], sizes = [1, 64], strides = [1, 1]} : vector<4x64xf32> to vector<1x64xf32>
    %18 = vector.broadcast %16 : vector<16x1xf32> to vector<16x64xf32>
    %19 = vector.broadcast %17 : vector<1x64xf32> to vector<16x64xf32>
    %20 = arith.mulf %18, %19 : vector<16x64xf32>
    %21 = arith.addf %15, %20 : vector<16x64xf32>
    %22 = vector.extract_strided_slice %3 {offsets = [0, 3], sizes = [16, 1], strides = [1, 1]} : vector<16x4xf32> to vector<16x1xf32>
    %23 = vector.extract_strided_slice %4 {offsets = [3, 0], sizes = [1, 64], strides = [1, 1]} : vector<4x64xf32> to vector<1x64xf32>
    %24 = vector.broadcast %22 : vector<16x1xf32> to vector<16x64xf32>
    %25 = vector.broadcast %23 : vector<1x64xf32> to vector<16x64xf32>
    %26 = arith.mulf %24, %25 : vector<16x64xf32>
    %27 = arith.addf %21, %26 : vector<16x64xf32>
    %c0_4 = arith.constant 0 : index
    %c0_5 = arith.constant 0 : index
    %28 = vector.load %arg4[%c0_4, %c0_5] : memref<1x64xf32, #tpu.memory_space<vmem>>, vector<1x64xf32>
    %29 = vector.broadcast %28 : vector<1x64xf32> to vector<16x64xf32>
    %30 = arith.addf %27, %29 : vector<16x64xf32>
    %cst = arith.constant 0.000000e+00 : f32
    %31 = vector.broadcast %cst : f32 to vector<16x64xf32>
    %32 = arith.maximumf %30, %31 : vector<16x64xf32>
    %33 = arith.truncf %32 : vector<16x64xf32> to vector<16x64xbf16>
    %c0_6 = arith.constant 0 : index
    %c0_7 = arith.constant 0 : index
    %34 = vector.load %arg5[%c0_6, %c0_7] : memref<64x128xbf16, #tpu.memory_space<vmem>>, vector<64x128xbf16>
    %cst_8 = arith.constant dense<0.000000e+00> : vector<16x128xf32>
    %35 = tpu.matmul %33, %34, %cst_8 {dimension_numbers = #tpu.dot_dimension_numbers<[1], [0], [0], [1], [0, 0, 1, 1], [], []>} : vector<16x64xbf16>, vector<64x128xbf16>, vector<16x128xf32> -> vector<16x128xf32>
    %c0_9 = arith.constant 0 : index
    %c0_10 = arith.constant 0 : index
    %36 = vector.load %arg6[%c0_9, %c0_10] : memref<1x128xf32, #tpu.memory_space<vmem>>, vector<1x128xf32>
    %37 = vector.broadcast %36 : vector<1x128xf32> to vector<16x128xf32>
    %38 = arith.addf %35, %37 : vector<16x128xf32>
    %cst_11 = arith.constant 0.000000e+00 : f32
    %39 = vector.broadcast %cst_11 : f32 to vector<16x128xf32>
    %40 = arith.maximumf %38, %39 : vector<16x128xf32>
    %41 = arith.truncf %40 : vector<16x128xf32> to vector<16x128xbf16>
    %c0_12 = arith.constant 0 : index
    %c0_13 = arith.constant 0 : index
    %42 = vector.load %arg7[%c0_12, %c0_13] : memref<128x512xbf16, #tpu.memory_space<vmem>>, vector<128x512xbf16>
    %cst_14 = arith.constant dense<0.000000e+00> : vector<16x512xf32>
    %43 = tpu.matmul %41, %42, %cst_14 {dimension_numbers = #tpu.dot_dimension_numbers<[1], [0], [0], [1], [0, 0, 1, 1], [], []>} : vector<16x128xbf16>, vector<128x512xbf16>, vector<16x512xf32> -> vector<16x512xf32>
    %44 = vector.shape_cast %43 : vector<16x512xf32> to vector<1x16x512xf32>
    %cst_15 = arith.constant dense<0xFF800000> : vector<1x512xf32>
    %45 = vector.multi_reduction <maximumf>, %44, %cst_15 [1] : vector<1x16x512xf32> to vector<1x512xf32>
    %c0_16 = arith.constant 0 : index
    %c0_17 = arith.constant 0 : index
    %46 = vector.load %arg10[%c0_16, %c0_17] : memref<1x512xf32, #tpu.memory_space<vmem>>, vector<1x512xf32>
    %47 = arith.maximumf %46, %45 : vector<1x512xf32>
    %c0_18 = arith.constant 0 : index
    %c0_19 = arith.constant 0 : index
    %48 = vector.load %arg10[%c0_18, %c0_19] : memref<1x512xf32, #tpu.memory_space<vmem>>, vector<1x512xf32>
    tpu.vector_store %arg10[%c0_18, %c0_19], %47 {strides = array<i32>} : memref<1x512xf32, #tpu.memory_space<vmem>>, vector<1x512xf32>,
    %c0_i32_20 = arith.constant 0 : i32
    %49 = arith.cmpi eq, %arg1, %c0_i32_20 : i32
    %50 = arith.extui %49 : i1 to i32
    %c0_i32_21 = arith.constant 0 : i32
    %51 = arith.cmpi ne, %50, %c0_i32_21 : i32
    scf.if %51 {
      %c0_22 = arith.constant 0 : index
      %c0_23 = arith.constant 0 : index
      %52 = vector.load %arg10[%c0_22, %c0_23] : memref<1x512xf32, #tpu.memory_space<vmem>>, vector<1x512xf32>
      %c0_24 = arith.constant 0 : index
      %c0_25 = arith.constant 0 : index
      %53 = vector.load %arg8[%c0_24, %c0_25] : memref<1x512xf32, #tpu.memory_space<vmem>>, vector<1x512xf32>
      %54 = arith.addf %52, %53 : vector<1x512xf32>
      %55 = vector.shape_cast %54 : vector<1x512xf32> to vector<1x1x512xf32>
      %c0_26 = arith.constant 0 : index
      %c0_27 = arith.constant 0 : index
      %c0_28 = arith.constant 0 : index
      %56 = vector.load %arg9[%c0_26, %c0_27, %c0_28] : memref<1x1x512xf32, #tpu.memory_space<vmem>>, vector<1x1x512xf32>
      tpu.vector_store %arg9[%c0_26, %c0_27, %c0_28], %55 {strides = array<i32>} : memref<1x1x512xf32, #tpu.memory_space<vmem>>, vector<1x1x512xf32>,
    } else {
    }
    return
  }
  func.func @transform_0(%arg0: i32, %arg1: i32) -> (i32, i32) {
    %c1_i32 = arith.constant 1 : i32
    %0 = arith.muli %arg0, %c1_i32 : i32
    %1 = arith.addi %0, %arg1 : i32
    %c0_i32 = arith.constant 0 : i32
    %c0_i32_0 = arith.constant 0 : i32
    return %1, %c0_i32 : i32, i32
  }
  func.func @transform_1(%arg0: i32, %arg1: i32) -> (i32, i32) {
    %c0_i32 = arith.constant 0 : i32
    %c0_i32_0 = arith.constant 0 : i32
    %c0_i32_1 = arith.constant 0 : i32
    return %c0_i32, %c0_i32_0 : i32, i32
  }
  func.func @transform_2(%arg0: i32, %arg1: i32) -> (i32, i32) {
    %c0_i32 = arith.constant 0 : i32
    %c0_i32_0 = arith.constant 0 : i32
    %c0_i32_1 = arith.constant 0 : i32
    return %c0_i32, %c0_i32_0 : i32, i32
  }
  func.func @transform_3(%arg0: i32, %arg1: i32) -> (i32, i32) {
    %c0_i32 = arith.constant 0 : i32
    %c0_i32_0 = arith.constant 0 : i32
    %c0_i32_1 = arith.constant 0 : i32
    return %c0_i32, %c0_i32_0 : i32, i32
  }
  func.func @transform_4(%arg0: i32, %arg1: i32) -> (i32, i32) {
    %c0_i32 = arith.constant 0 : i32
    %c0_i32_0 = arith.constant 0 : i32
    %c0_i32_1 = arith.constant 0 : i32
    return %c0_i32, %c0_i32_0 : i32, i32
  }
  func.func @transform_5(%arg0: i32, %arg1: i32) -> (i32, i32) {
    %c0_i32 = arith.constant 0 : i32
    %c0_i32_0 = arith.constant 0 : i32
    %c0_i32_1 = arith.constant 0 : i32
    return %c0_i32, %c0_i32_0 : i32, i32
  }
  func.func @transform_6(%arg0: i32, %arg1: i32) -> (i32, i32) {
    %c0_i32 = arith.constant 0 : i32
    %c0_i32_0 = arith.constant 0 : i32
    %c0_i32_1 = arith.constant 0 : i32
    return %c0_i32, %c0_i32_0 : i32, i32
  }
  func.func @transform_7(%arg0: i32, %arg1: i32) -> (i32, i32, i32) {
    %c0_i32 = arith.constant 0 : i32
    %c0_i32_0 = arith.constant 0 : i32
    %c0_i32_1 = arith.constant 0 : i32
    return %arg0, %c0_i32, %c0_i32_0 : i32, i32, i32
  }
}

</mosaic_0001>

<llo_original>
// kernel: pointnet_cmap_encoder.1
$region0: #{pointnet_cmap_encoder.1}
  #allocation0 [shape = 'u32[]', space=smem, size = 0x4, offset = 0x4, fixed_abs, tag = 'smem constant byte address 0x4 - core index']
  #allocation1 [shape = 'u32[144,128]{1,0:T(1,128)}', space=vmem, size = 0x12000, scoped, tag = 'internal scratch']
  #allocation2 [shape = 'f32[1,512]{1,0:T(1,128)}', space=vmem, size = 0x800, scoped, tag = 'scratch operand']
  %s0 = inlined_call_operand.vmem [shape: f32[32,4], index: 0, kind: input, shape index: {}]
  %s1 = inlined_call_operand.vmem [shape: f32[4,64], index: 1, kind: input, shape index: {}]
  %s2 = inlined_call_operand.vmem [shape: f32[1,64], index: 2, kind: input, shape index: {}]
  %s3 = inlined_call_operand.vmem [shape: bf16[64,128], index: 3, kind: input, shape index: {}]
  %s4 = inlined_call_operand.vmem [shape: f32[1,128], index: 4, kind: input, shape index: {}]
  %s5 = inlined_call_operand.vmem [shape: bf16[128,512], index: 5, kind: input, shape index: {}]
  %s6 = inlined_call_operand.vmem [shape: f32[1,512], index: 6, kind: input, shape index: {}]
  %s7 = inlined_call_operand.vmem [shape: f32[2,1,512], index: 7, kind: output, shape index: {}]
  %s8 = sld [smem:[#allocation0]]
  $region69: #{pointnet_cmap_encoder.1} parent=0
    _
  %s10 = ssub.s32 1, %s8
  %s11 = scalar_select 0, %s10, %s8
  loop: start=0, step=1, limit=4
  $region2: #{pointnet_cmap_encoder.1} parent=0 // loop_pre_header
    _
  $region3: #{pointnet_cmap_encoder.1} parent=0 // loop_header
    %s13 = sphi 0, %s17
    %p14 = scmp.ge.s32.totalorder %s13, 4
    %s20 = sphi 0, %s32
    %s21 = sphi 0, %s28
    %s22 = sphi 0, %s20
    %s23 = sphi 0, %s21
    %s24 = sphi 0, %s22
    %s25 = sphi 0, %s23
    %s37 = sphi 0, %s39
    %s40 = sphi 0, %s37
    %s41 = sphi 0, %s40
    %s57 = sphi 0, %s41
    %s61 = sphi 0, %s61
    %s63 = sphi 0, %s61
    %s64 = sphi 0, %s63
    %s78 = sphi 0, %s64
    %s82 = sphi 0, %s82
    %s84 = sphi 0, %s82
    %s85 = sphi 0, %s84
    %s99 = sphi 0, %s85
    %s103 = sphi 0, %s103
    %s105 = sphi 0, %s103
    %s106 = sphi 0, %s105
    %s120 = sphi 0, %s106
    %s124 = sphi 0, %s124
    %s126 = sphi 0, %s124
    %s127 = sphi 0, %s126
    %s141 = sphi 0, %s127
    %s145 = sphi 0, %s145
    %s147 = sphi 0, %s145
    %s148 = sphi 0, %s147
    %s162 = sphi 0, %s148
    %s166 = sphi 0, %s166
    %s168 = sphi 0, %s166
    %s169 = sphi 0, %s168
    %s183 = sphi 0, %s169
    %s189 = sphi 0, %s191
    %s192 = sphi 0, %s189
    %s193 = sphi 0, %s192
    %s209 = sphi 0, %s193
  $region4: #{pointnet_cmap_encoder.1} parent=0 // loop_header_branch
    %16 = sbr.rel (%p14) target = $region8
  $region5: #{pointnet_cmap_encoder.1} parent=0 // loop_body
    %s18 = ssub.s32 %s13, 1
    %s19 = ssub.s32 %s13, 2
    %s26 = sadd.s32 1, %s21
    %p27 = scmp.ge.s32.totalorder %s26, 1
    %s28 = scalar_select %p27, 0, %s26
    %s29 = sadd.s32 1, %s20
    %s30 = scalar_select %p27, %s29, %s20
    %p31 = scmp.ge.s32.totalorder %s30, 2
    %s32 = scalar_select %p31, 0, %s30
    %s33 = sadd.s32 %s20, %s21
    %s34 = sadd.s32 %s32, %s28
    %s35 = ssub.s32 %s33, %s34
    %p36 = scmp.eq.s32.totalorder %s35, 0
    %s38 = sadd.s32 %s37, 1
    %s39 = scalar_select %p36, %s37, %s38
    %p42 = pneg %p36
    %p43 = scmp.eq.s32.totalorder %s13, 1
    %p44 = por %p42, %p43
    %p45 = scmp.ne.s32.totalorder %s37, %s40
    %p46 = scmp.eq.s32.totalorder %s13, 0
    %p47 = por %p45, %p46
    %p48 = scmp.ne.s32.totalorder %s37, %s40
    %p49 = scmp.eq.s32.totalorder %s18, 1
    %p50 = por %p48, %p49
    %p51 = scmp.ne.s32.totalorder %s40, %s41
    %p52 = scmp.eq.s32.totalorder %s18, 0
    %p53 = por %p51, %p52
    %p54 = scmp.ne.s32.totalorder %s40, %s41
    %p55 = scmp.eq.s32.totalorder %s19, 1
    %p56 = por %p54, %p55
    %p58 = scmp.ne.s32.totalorder %s41, %s57
    %p59 = scmp.eq.s32.totalorder %s19, 0
    %p60 = por %p58, %p59
    %s62 = sadd.s32 %s61, 1
    %p65 = scmp.eq.s32.totalorder %s13, 1
    %p66 = scmp.ne.s32.totalorder %s61, %s63
    %p67 = scmp.eq.s32.totalorder %s13, 0
    %p68 = por %p66, %p67
    %p69 = scmp.ne.s32.totalorder %s61, %s63
    %p70 = scmp.eq.s32.totalorder %s18, 1
    %p71 = por %p69, %p70
    %p72 = scmp.ne.s32.totalorder %s63, %s64
    %p73 = scmp.eq.s32.totalorder %s18, 0
    %p74 = por %p72, %p73
    %p75 = scmp.ne.s32.totalorder %s63, %s64
    %p76 = scmp.eq.s32.totalorder %s19, 1
    %p77 = por %p75, %p76
    %p79 = scmp.ne.s32.totalorder %s64, %s78
    %p80 = scmp.eq.s32.totalorder %s19, 0
    %p81 = por %p79, %p80
    %s83 = sadd.s32 %s82, 1
    %p86 = scmp.eq.s32.totalorder %s13, 1
    %p87 = scmp.ne.s32.totalorder %s82, %s84
    %p88 = scmp.eq.s32.totalorder %s13, 0
    %p89 = por %p87, %p88
    %p90 = scmp.ne.s32.totalorder %s82, %s84
    %p91 = scmp.eq.s32.totalorder %s18, 1
    %p92 = por %p90, %p91
    %p93 = scmp.ne.s32.totalorder %s84, %s85
    %p94 = scmp.eq.s32.totalorder %s18, 0
    %p95 = por %p93, %p94
    %p96 = scmp.ne.s32.totalorder %s84, %s85
    %p97 = scmp.eq.s32.totalorder %s19, 1
    %p98 = por %p96, %p97
    %p100 = scmp.ne.s32.totalorder %s85, %s99
    %p101 = scmp.eq.s32.totalorder %s19, 0
    %p102 = por %p100, %p101
    %s104 = sadd.s32 %s103, 1
    %p107 = scmp.eq.s32.totalorder %s13, 1
    %p108 = scmp.ne.s32.totalorder %s103, %s105
    %p109 = scmp.eq.s32.totalorder %s13, 0
    %p110 = por %p108, %p109
    %p111 = scmp.ne.s32.totalorder %s103, %s105
    %p112 = scmp.eq.s32.totalorder %s18, 1
    %p113 = por %p111, %p112
    %p114 = scmp.ne.s32.totalorder %s105, %s106
    %p115 = scmp.eq.s32.totalorder %s18, 0
    %p116 = por %p114, %p115
    %p117 = scmp.ne.s32.totalorder %s105, %s106
    %p118 = scmp.eq.s32.totalorder %s19, 1
    %p119 = por %p117, %p118
    %p121 = scmp.ne.s32.totalorder %s106, %s120
    %p122 = scmp.eq.s32.totalorder %s19, 0
    %p123 = por %p121, %p122
    %s125 = sadd.s32 %s124, 1
    %p128 = scmp.eq.s32.totalorder %s13, 1
    %p129 = scmp.ne.s32.totalorder %s124, %s126
    %p130 = scmp.eq.s32.totalorder %s13, 0
    %p131 = por %p129, %p130
    %p132 = scmp.ne.s32.totalorder %s124, %s126
    %p133 = scmp.eq.s32.totalorder %s18, 1
    %p134 = por %p132, %p133
    %p135 = scmp.ne.s32.totalorder %s126, %s127
    %p136 = scmp.eq.s32.totalorder %s18, 0
    %p137 = por %p135, %p136
    %p138 = scmp.ne.s32.totalorder %s126, %s127
    %p139 = scmp.eq.s32.totalorder %s19, 1
    %p140 = por %p138, %p139
    %p142 = scmp.ne.s32.totalorder %s127, %s141
    %p143 = scmp.eq.s32.totalorder %s19, 0
    %p144 = por %p142, %p143
    %s146 = sadd.s32 %s145, 1
    %p149 = scmp.eq.s32.totalorder %s13, 1
    %p150 = scmp.ne.s32.totalorder %s145, %s147
    %p151 = scmp.eq.s32.totalorder %s13, 0
    %p152 = por %p150, %p151
    %p153 = scmp.ne.s32.totalorder %s145, %s147
    %p154 = scmp.eq.s32.totalorder %s18, 1
    %p155 = por %p153, %p154
    %p156 = scmp.ne.s32.totalorder %s147, %s148
    %p157 = scmp.eq.s32.totalorder %s18, 0
    %p158 = por %p156, %p157
    %p159 = scmp.ne.s32.totalorder %s147, %s148
    %p160 = scmp.eq.s32.totalorder %s19, 1
    %p161 = por %p159, %p160
    %p163 = scmp.ne.s32.totalorder %s148, %s162
    %p164 = scmp.eq.s32.totalorder %s19, 0
    %p165 = por %p163, %p164
    %s167 = sadd.s32 %s166, 1
    %p170 = scmp.eq.s32.totalorder %s13, 1
    %p171 = scmp.ne.s32.totalorder %s166, %s168
    %p172 = scmp.eq.s32.totalorder %s13, 0
    %p173 = por %p171, %p172
    %p174 = scmp.ne.s32.totalorder %s166, %s168
    %p175 = scmp.eq.s32.totalorder %s18, 1
    %p176 = por %p174, %p175
    %p177 = scmp.ne.s32.totalorder %s168, %s169
    %p178 = scmp.eq.s32.totalorder %s18, 0
    %p179 = por %p177, %p178
    %p180 = scmp.ne.s32.totalorder %s168, %s169
    %p181 = scmp.eq.s32.totalorder %s19, 1
    %p182 = por %p180, %p181
    %p184 = scmp.ne.s32.totalorder %s169, %s183
    %p185 = scmp.eq.s32.totalorder %s19, 0
    %p186 = por %p184, %p185
    %s187 = ssub.s32 %s20, %s32
    %p188 = scmp.eq.s32.totalorder %s187, 0
    %s190 = sadd.s32 %s189, 1
    %s191 = scalar_select %p188, %s189, %s190
    %p194 = pneg %p188
    %p195 = scmp.eq.s32.totalorder %s13, 1
    %p196 = por %p194, %p195
    %p197 = scmp.ne.s32.totalorder %s189, %s192
    %p198 = scmp.eq.s32.totalorder %s13, 0
    %p199 = por %p197, %p198
    %p200 = scmp.ne.s32.totalorder %s189, %s192
    %p201 = scmp.eq.s32.totalorder %s18, 1
    %p202 = por %p200, %p201
    %p203 = scmp.ne.s32.totalorder %s192, %s193
    %p204 = scmp.eq.s32.totalorder %s18, 0
    %p205 = por %p203, %p204
    %p206 = scmp.ne.s32.totalorder %s192, %s193
    %p207 = scmp.eq.s32.totalorder %s19, 1
    %p208 = por %p206, %p207
    %p210 = scmp.ne.s32.totalorder %s193, %s209
    %p211 = scmp.eq.s32.totalorder %s19, 0
    %p212 = por %p210, %p211
    %p213 = scmp.le.s32.totalorder 1, %s13
    %p214 = scmp.lt.s32.totalorder %s13, 3
    %p215 = pnand %p213, %p214
    %p216 = pneg %p215
    // Predicated region
    $region9: #{pointnet_cmap_encoder.1} parent=5 // pred_check
      _
    $region10: #{pointnet_cmap_encoder.1} parent=5 // pred_check_branch
      %218 = sbr.rel (%p215) target = $region12
    $region11: #{pointnet_cmap_encoder.1} parent=5 // pred_region
      %s219 = ssub.s32 %s13, 1
      // Predicated region
      $region13: #{pointnet_cmap_encoder.1} parent=11 // pred_check
        %p220 = pneg %p74
      $region14: #{pointnet_cmap_encoder.1} parent=11 // pred_check_branch
        %222 = sbr.rel (%p220) target = $region16
      $region15: #{pointnet_cmap_encoder.1} parent=11 // pred_region
        _
      $region16: #{pointnet_cmap_encoder.1} parent=11 // pred_fallthru
        _
      // Predicated region
      $region17: #{pointnet_cmap_encoder.1} parent=11 // pred_check
        %p223 = pneg %p95
      $region18: #{pointnet_cmap_encoder.1} parent=11 // pred_check_branch
        %225 = sbr.rel (%p223) target = $region20
      $region19: #{pointnet_cmap_encoder.1} parent=11 // pred_region
        _
      $region20: #{pointnet_cmap_encoder.1} parent=11 // pred_fallthru
        _
      // Predicated region
      $region21: #{pointnet_cmap_encoder.1} parent=11 // pred_check
        %p226 = pneg %p116
      $region22: #{pointnet_cmap_encoder.1} parent=11 // pred_check_branch
        %228 = sbr.rel (%p226) target = $region24
      $region23: #{pointnet_cmap_encoder.1} parent=11 // pred_region
        _
      $region24: #{pointnet_cmap_encoder.1} parent=11 // pred_fallthru
        _
      // Predicated region
      $region25: #{pointnet_cmap_encoder.1} parent=11 // pred_check
        %p229 = pneg %p137
      $region26: #{pointnet_cmap_encoder.1} parent=11 // pred_check_branch
        %231 = sbr.rel (%p229) target = $region28
      $region27: #{pointnet_cmap_encoder.1} parent=11 // pred_region
        _
      $region28: #{pointnet_cmap_encoder.1} parent=11 // pred_fallthru
        _
      // Predicated region
      $region29: #{pointnet_cmap_encoder.1} parent=11 // pred_check
        %p232 = pneg %p158
      $region30: #{pointnet_cmap_encoder.1} parent=11 // pred_check_branch
        %234 = sbr.rel (%p232) target = $region32
      $region31: #{pointnet_cmap_encoder.1} parent=11 // pred_region
        _
      $region32: #{pointnet_cmap_encoder.1} parent=11 // pred_fallthru
        _
      // Predicated region
      $region33: #{pointnet_cmap_encoder.1} parent=11 // pred_check
        %p235 = pneg %p179
      $region34: #{pointnet_cmap_encoder.1} parent=11 // pred_check_branch
        %237 = sbr.rel (%p235) target = $region36
      $region35: #{pointnet_cmap_encoder.1} parent=11 // pred_region
        _
      $region36: #{pointnet_cmap_encoder.1} parent=11 // pred_fallthru
        _
    $region12: #{pointnet_cmap_encoder.1} parent=5 // pred_fallthru
      _
    %p238 = scmp.lt.s32.totalorder %s13, 2
    // Predicated region
    $region37: #{pointnet_cmap_encoder.1} parent=5 // pred_check
      %p239 = pneg %p238
    $region38: #{pointnet_cmap_encoder.1} parent=5 // pred_check_branch
      %241 = sbr.rel (%p239) target = $region40
    $region39: #{pointnet_cmap_encoder.1} parent=5 // pred_region
      // Predicated region
      $region41: #{pointnet_cmap_encoder.1} parent=39 // pred_check
        %p242 = pneg %p47
      $region42: #{pointnet_cmap_encoder.1} parent=39 // pred_check_branch
        %244 = sbr.rel (%p242) target = $region44
      $region43: #{pointnet_cmap_encoder.1} parent=39 // pred_region
        %s245 = sadd.s32 %s20, %s21
        %s246 = smul.u32 2, %s245
        %p247 = scmp.lt.s32.totalorder %s246, 3
        %s248 = scalar_select %p247, %s246, 3
        %s249 = smul.addr %s248, 8
        %s250 = scalar_lea.vmem %s0, %s249
        %s251 = sadd.s32 %s20, %s21
        %s252 = smul.u32 2, %s251
      $region44: #{pointnet_cmap_encoder.1} parent=39 // pred_fallthru
        _
    $region40: #{pointnet_cmap_encoder.1} parent=5 // pred_fallthru
      _
    %p253 = scmp.le.s32.totalorder 1, %s13
    %p254 = scmp.lt.s32.totalorder %s13, 3
    %p255 = pnand %p253, %p254
    %p256 = pneg %p255
    // Predicated region
    $region45: #{pointnet_cmap_encoder.1} parent=5 // pred_check
      _
    $region46: #{pointnet_cmap_encoder.1} parent=5 // pred_check_branch
      %258 = sbr.rel (%p255) target = $region48
    $region47: #{pointnet_cmap_encoder.1} parent=5 // pred_region
      %s259 = ssub.s32 %s13, 1
      %s260 = sadd.s32 %s22, %s23
      %s261 = smul.u32 2, %s260
      %p262 = scmp.lt.s32.totalorder %s261, 3
      %s263 = scalar_select %p262, %s261, 3
      %s264 = smul.addr %s263, 8
      %s265 = scalar_lea.vmem %s0, %s264
      %p266 = pneg %p53
      %p267 = pneg %p50
      %p268 = pneg %p74
      %p269 = pneg %p71
      %p270 = pneg %p95
      %p271 = pneg %p92
      %p272 = pneg %p116
      %p273 = pneg %p113
      %p274 = pneg %p137
      %p275 = pneg %p134
      %p276 = pneg %p158
      %p277 = pneg %p155
      %p278 = pneg %p179
      %p279 = pneg %p176
      %p280 = pneg %p205
      %p281 = pneg %p202
      %p282 = scmp.lt.s32.totalorder %s22, 1
      %s283 = scalar_select %p282, %s22, 1
      %s284 = smul.addr %s283, 4
      %s285 = scalar_lea.vmem %s7, %s284
      %s286 = sadd.s32 %s22, %s23
      %s287 = smul.u32 2, %s286
      %p288 = scmp.lt.s32.totalorder %s287, 3
      %s289 = scalar_select %p288, %s287, 3
      %s290 = smul.addr %s289, 8
      %s291 = scalar_lea.vmem %s0, %s290
      %s292 = sadd.s32 %s22, %s23
      %s293 = smul.u32 2, %s292
      %p294 = scmp.lt.s32.totalorder %s22, 1
      %s295 = scalar_select %p294, %s22, 1
      %s296 = smul.addr %s295, 4
      %s297 = scalar_lea.vmem %s7, %s296
      %p299 = scmp.eq.s32.totalorder %s23, 0
      // Predicated region
      $region49: #{pointnet_cmap_encoder.1} parent=47 // pred_check
        %p300 = pneg %p299
      $region50: #{pointnet_cmap_encoder.1} parent=47 // pred_check_branch
        %302 = sbr.rel (%p300) target = $region52
      $region51: #{pointnet_cmap_encoder.1} parent=47 // pred_region
        %v303 = vlaneseq
        %vm304 = vcmp.ge.s32.totalorder %v303, 0
        %vm305 = vcmp.lt.s32.totalorder %v303, 512
        %vm306 = vmand %vm304, %vm305
        %307 = vst.msk [vmem:[#allocation2] sm:$0xf] %vm306, -inf
      $region52: #{pointnet_cmap_encoder.1} parent=47 // pred_fallthru
        _
      %v308 = vld [vmem:[%s291] sm:$0xff]
      %v309 = vld [vmem:[%s291 + $0x8] sm:$0xff]
      %v310 = vld [vmem:[%s1] sm:$0xf]
      %312 = vset.pattern.permute.xlu0 0
      %313 = vperm.xlu0 %312, %v308
      %v314 = vpop.permute.xlu0 %313
      %317 = vset.pattern.permute.xlu0 0
      %318 = vperm.xlu0 %317, %v309
      %v319 = vpop.permute.xlu0 %318
      %v321 = vlaneseq
      %v322 = vshrl.u32 %v321, 7
      %v323 = vsub.s32 0, %v322
      %v324 = vrot.slane %v310, %v323
      %v325 = vmul.f32 %v314, %v324
      %v326 = vmul.f32 %v319, %v324
      %327 = vset.pattern.permute.xlu0 1
      %328 = vperm.xlu0 %327, %v308
      %v329 = vpop.permute.xlu0 %328
      %331 = vset.pattern.permute.xlu0 1
      %332 = vperm.xlu0 %331, %v309
      %v333 = vpop.permute.xlu0 %332
      %v335 = vlaneseq
      %v336 = vshrl.u32 %v335, 7
      %v337 = vsub.s32 1, %v336
      %v338 = vrot.slane %v310, %v337
      %v339 = vmul.f32 %v329, %v338
      %v340 = vmul.f32 %v333, %v338
      %v341 = vadd.f32 %v325, %v339
      %v342 = vadd.f32 %v326, %v340
      %343 = vset.pattern.permute.xlu0 2
      %344 = vperm.xlu0 %343, %v308
      %v345 = vpop.permute.xlu0 %344
      %347 = vset.pattern.permute.xlu0 2
      %348 = vperm.xlu0 %347, %v309
      %v349 = vpop.permute.xlu0 %348
      %v351 = vlaneseq
      %v352 = vshrl.u32 %v351, 7
      %v353 = vsub.s32 2, %v352
      %v354 = vrot.slane %v310, %v353
      %v355 = vmul.f32 %v345, %v354
      %v356 = vmul.f32 %v349, %v354
      %v357 = vadd.f32 %v341, %v355
      %v358 = vadd.f32 %v342, %v356
      %359 = vset.pattern.permute.xlu0 3
      %360 = vperm.xlu0 %359, %v308
      %v361 = vpop.permute.xlu0 %360
      %363 = vset.pattern.permute.xlu0 3
      %364 = vperm.xlu0 %363, %v309
      %v365 = vpop.permute.xlu0 %364
      %v367 = vlaneseq
      %v368 = vshrl.u32 %v367, 7
      %v369 = vsub.s32 3, %v368
      %v370 = vrot.slane %v310, %v369
      %v371 = vmul.f32 %v361, %v370
      %v372 = vmul.f32 %v365, %v370
      %v373 = vadd.f32 %v357, %v371
      %v374 = vadd.f32 %v358, %v372
      %v375 = vld [vmem:[%s2] sm:$0x1]
      %v377 = vlaneseq
      %v378 = vshrl.u32 %v377, 7
      %v379 = vsub.s32 0, %v378
      %v380 = vrot.slane %v375, %v379
      %v382 = vadd.f32 %v373, %v380
      %v383 = vadd.f32 %v374, %v380
      %v384 = vmax.f32 %v382, 0.0
      %v385 = vmax.f32 %v383, 0.0
      %v386 = vpack.c.bf16 %v385, %v384
      %v387 = vld [vmem:[%s3] sm:$0xf]
      %v388 = vld [vmem:[%s3 + $0x4] sm:$0xf]
      %v389 = vld [vmem:[%s3 + $0x8] sm:$0xf]
      %v390 = vld [vmem:[%s3 + $0xc] sm:$0xf]
      %v391 = vld [vmem:[%s3 + $0x10] sm:$0xf]
      %v392 = vld [vmem:[%s3 + $0x14] sm:$0xf]
      %v393 = vld [vmem:[%s3 + $0x18] sm:$0xf]
      %v394 = vld [vmem:[%s3 + $0x1c] sm:$0xf]
      %v395 = vld [vmem:[%s4] sm:$0x1]
      %v397 = vlaneseq
      %v398 = vshrl.u32 %v397, 7
      %v399 = vsub.s32 0, %v398
      %v400 = vrot.slane %v395, %v399
      %v410 = vunpack.c.l.b16 %v387
      %v411 = vunpack.c.l.b16 %v388
      %v412 = vunpack.c.l.b16 %v389
      %v413 = vunpack.c.l.b16 %v390
      %v414 = vunpack.c.l.b16 %v391
      %v415 = vunpack.c.l.b16 %v392
      %v416 = vunpack.c.l.b16 %v393
      %v417 = vunpack.c.l.b16 %v394
      %v418 = vpack.c.b16 %v411, %v410
      %v419 = vpack.c.b16 %v413, %v412
      %v420 = vpack.c.b16 %v415, %v414
      %v421 = vpack.c.b16 %v417, %v416
      %vm426 = vcmask 523264
      %v428 = vsel %vm426, %v386, 0
      %430 = vmatprep.subr.bf16.mxu0 0
      %431 = vmatpush1.bf16.msra.mxu0 0
      %432 = vmatprep.subr.bf16.mxu0 0
      %433 = vmatpush1.bf16.msra.mxu0 0
      %434 = vmatprep.subr.bf16.mxu0 0
      %435 = vmatpush1.bf16.msra.mxu0 0
      %436 = vmatprep.subr.bf16.mxu0 0
      %437 = vmatpush1.bf16.msra.mxu0 0
      %438 = vmatprep.subr.bf16.mxu0 0
      %439 = vmatpush1.bf16.msra.mxu0 %v421
      %440 = vmatprep.subr.bf16.mxu0 0
      %441 = vmatpush1.bf16.msra.mxu0 %v420
      %442 = vmatprep.subr.bf16.mxu0 0
      %443 = vmatpush1.bf16.msra.mxu0 %v419
      %444 = vmatprep.subr.bf16.mxu0 0
      %445 = vmatpush1.bf16.msra.mxu0 %v418
      %446 = vmatprep.subr.bf16.mxu0 0
      %447 = vmatpush2.bf16.msra.mxu0 0
      %448 = vmatprep.subr.bf16.mxu0 0
      %449 = vmatpush2.bf16.msra.mxu0 0
      %450 = vmatprep.subr.bf16.mxu0 0
      %451 = vmatpush2.bf16.msra.mxu0 0
      %452 = vmatprep.subr.bf16.mxu0 0
      %453 = vmatpush2.bf16.msra.mxu0 0
      %454 = vmatprep.subr.bf16.mxu0 0
      %455 = vmatpush2.bf16.msra.mxu0 0
      %456 = vmatprep.subr.bf16.mxu0 0
      %457 = vmatpush2.bf16.msra.mxu0 0
      %458 = vmatprep.subr.bf16.mxu0 0
      %459 = vmatpush2.bf16.msra.mxu0 0
      %460 = vmatprep.subr.bf16.mxu0 0
      %461 = vmatpush2.bf16.msra.mxu0 0
      %462 = vmatprep.mubr.bf16.mxu0 0
      %463 = vmatmul.mubr.bf16.gmra.mxu0 %v428
      %v464 = vpop.f32.mrf.mxu0
      %v465 = vadd.f32 %v400, %v464
      %v466 = vpop.f32.mrf.mxu0
      %v467 = vpop.f32.mrf.mxu0
      %v468 = vadd.f32 %v400, %v467
      %v469 = vpop.f32.mrf.mxu0
      %470 = vdwg.mxu0
      %v471 = vmax.f32 %v465, 0.0
      %v472 = vmax.f32 %v468, 0.0
      %v473 = vpack.c.bf16 %v472, %v471
      %v474 = vld [vmem:[%s5] sm:$0xff]
      %v475 = vld [vmem:[%s5 + $0x8] sm:$0xff]
      %v476 = vld [vmem:[%s5 + $0x10] sm:$0xff]
      %v477 = vld [vmem:[%s5 + $0x18] sm:$0xff]
      %v478 = vld [vmem:[%s5 + $0x20] sm:$0xff]
      %v479 = vld [vmem:[%s5 + $0x28] sm:$0xff]
      %v480 = vld [vmem:[%s5 + $0x30] sm:$0xff]
      %v481 = vld [vmem:[%s5 + $0x38] sm:$0xff]
      %v482 = vld [vmem:[%s5 + $0x40] sm:$0xff]
      %v483 = vld [vmem:[%s5 + $0x48] sm:$0xff]
      %v484 = vld [vmem:[%s5 + $0x50] sm:$0xff]
      %v485 = vld [vmem:[%s5 + $0x58] sm:$0xff]
      %v486 = vld [vmem:[%s5 + $0x60] sm:$0xff]
      %v487 = vld [vmem:[%s5 + $0x68] sm:$0xff]
      %v488 = vld [vmem:[%s5 + $0x70] sm:$0xff]
      %v489 = vld [vmem:[%s5 + $0x78] sm:$0xff]
      %v490 = vld [vmem:[%s5 + $0x80] sm:$0xff]
      %v491 = vld [vmem:[%s5 + $0x88] sm:$0xff]
      %v492 = vld [vmem:[%s5 + $0x90] sm:$0xff]
      %v493 = vld [vmem:[%s5 + $0x98] sm:$0xff]
      %v494 = vld [vmem:[%s5 + $0xa0] sm:$0xff]
      %v495 = vld [vmem:[%s5 + $0xa8] sm:$0xff]
      %v496 = vld [vmem:[%s5 + $0xb0] sm:$0xff]
      %v497 = vld [vmem:[%s5 + $0xb8] sm:$0xff]
      %v498 = vld [vmem:[%s5 + $0xc0] sm:$0xff]
      %v499 = vld [vmem:[%s5 + $0xc8] sm:$0xff]
      %v500 = vld [vmem:[%s5 + $0xd0] sm:$0xff]
      %v501 = vld [vmem:[%s5 + $0xd8] sm:$0xff]
      %v502 = vld [vmem:[%s5 + $0xe0] sm:$0xff]
      %v503 = vld [vmem:[%s5 + $0xe8] sm:$0xff]
      %v504 = vld [vmem:[%s5 + $0xf0] sm:$0xff]
      %v505 = vld [vmem:[%s5 + $0xf8] sm:$0xff]
      %v538 = vunpack.c.l.b16 %v474
      %v539 = vunpack.c.h.b16 %v474
      %v540 = vunpack.c.l.b16 %v475
      %v541 = vunpack.c.h.b16 %v475
      %v542 = vunpack.c.l.b16 %v476
      %v543 = vunpack.c.h.b16 %v476
      %v544 = vunpack.c.l.b16 %v477
      %v545 = vunpack.c.h.b16 %v477
      %v546 = vunpack.c.l.b16 %v478
      %v547 = vunpack.c.h.b16 %v478
      %v548 = vunpack.c.l.b16 %v479
      %v549 = vunpack.c.h.b16 %v479
      %v550 = vunpack.c.l.b16 %v480
      %v551 = vunpack.c.h.b16 %v480
      %v552 = vunpack.c.l.b16 %v481
      %v553 = vunpack.c.h.b16 %v481
      %v554 = vunpack.c.l.b16 %v482
      %v555 = vunpack.c.h.b16 %v482
      %v556 = vunpack.c.l.b16 %v483
      %v557 = vunpack.c.h.b16 %v483
      %v558 = vunpack.c.l.b16 %v484
      %v559 = vunpack.c.h.b16 %v484
      %v560 = vunpack.c.l.b16 %v485
      %v561 = vunpack.c.h.b16 %v485
      %v562 = vunpack.c.l.b16 %v486
      %v563 = vunpack.c.h.b16 %v486
      %v564 = vunpack.c.l.b16 %v487
      %v565 = vunpack.c.h.b16 %v487
      %v566 = vunpack.c.l.b16 %v488
      %v567 = vunpack.c.h.b16 %v488
      %v568 = vunpack.c.l.b16 %v489
      %v569 = vunpack.c.h.b16 %v489
      %v570 = vunpack.c.l.b16 %v490
      %v571 = vunpack.c.h.b16 %v490
      %v572 = vunpack.c.l.b16 %v491
      %v573 = vunpack.c.h.b16 %v491
      %v574 = vunpack.c.l.b16 %v492
      %v575 = vunpack.c.h.b16 %v492
      %v576 = vunpack.c.l.b16 %v493
      %v577 = vunpack.c.h.b16 %v493
      %v578 = vunpack.c.l.b16 %v494
      %v579 = vunpack.c.h.b16 %v494
      %v580 = vunpack.c.l.b16 %v495
      %v581 = vunpack.c.h.b16 %v495
      %v582 = vunpack.c.l.b16 %v496
      %v583 = vunpack.c.h.b16 %v496
      %v584 = vunpack.c.l.b16 %v497
      %v585 = vunpack.c.h.b16 %v497
      %v586 = vunpack.c.l.b16 %v498
      %v587 = vunpack.c.h.b16 %v498
      %v588 = vunpack.c.l.b16 %v499
      %v589 = vunpack.c.h.b16 %v499
      %v590 = vunpack.c.l.b16 %v500
      %v591 = vunpack.c.h.b16 %v500
      %v592 = vunpack.c.l.b16 %v501
      %v593 = vunpack.c.h.b16 %v501
      %v594 = vunpack.c.l.b16 %v502
      %v595 = vunpack.c.h.b16 %v502
      %v596 = vunpack.c.l.b16 %v503
      %v597 = vunpack.c.h.b16 %v503
      %v598 = vunpack.c.l.b16 %v504
      %v599 = vunpack.c.h.b16 %v504
      %v600 = vunpack.c.l.b16 %v505
      %v601 = vunpack.c.h.b16 %v505
      %v602 = vpack.c.b16 %v542, %v538
      %v603 = vpack.c.b16 %v543, %v539
      %v604 = vpack.c.b16 %v544, %v540
      %v605 = vpack.c.b16 %v545, %v541
      %v606 = vpack.c.b16 %v550, %v546
      %v607 = vpack.c.b16 %v551, %v547
      %v608 = vpack.c.b16 %v552, %v548
      %v609 = vpack.c.b16 %v553, %v549
      %v610 = vpack.c.b16 %v558, %v554
      %v611 = vpack.c.b16 %v559, %v555
      %v612 = vpack.c.b16 %v560, %v556
      %v613 = vpack.c.b16 %v561, %v557
      %v614 = vpack.c.b16 %v566, %v562
      %v615 = vpack.c.b16 %v567, %v563
      %v616 = vpack.c.b16 %v568, %v564
      %v617 = vpack.c.b16 %v569, %v565
      %v618 = vpack.c.b16 %v574, %v570
      %v619 = vpack.c.b16 %v575, %v571
      %v620 = vpack.c.b16 %v576, %v572
      %v621 = vpack.c.b16 %v577, %v573
      %v622 = vpack.c.b16 %v582, %v578
      %v623 = vpack.c.b16 %v583, %v579
      %v624 = vpack.c.b16 %v584, %v580
      %v625 = vpack.c.b16 %v585, %v581
      %v626 = vpack.c.b16 %v590, %v586
      %v627 = vpack.c.b16 %v591, %v587
      %v628 = vpack.c.b16 %v592, %v588
      %v629 = vpack.c.b16 %v593, %v589
      %v630 = vpack.c.b16 %v598, %v594
      %v631 = vpack.c.b16 %v599, %v595
      %v632 = vpack.c.b16 %v600, %v596
      %v633 = vpack.c.b16 %v601, %v597
      %666 = vmatprep.subr.bf16.mxu0 %v631
      %667 = vmatpush1.bf16.msra.mxu0 %v630
      %668 = vmatprep.subr.bf16.mxu0 %v627
      %669 = vmatpush1.bf16.msra.mxu0 %v626
      %670 = vmatprep.subr.bf16.mxu0 %v623
      %671 = vmatpush1.bf16.msra.mxu0 %v622
      %672 = vmatprep.subr.bf16.mxu0 %v619
      %673 = vmatpush1.bf16.msra.mxu0 %v618
      %674 = vmatprep.subr.bf16.mxu0 %v615
      %675 = vmatpush1.bf16.msra.mxu0 %v614
      %676 = vmatprep.subr.bf16.mxu0 %v611
      %677 = vmatpush1.bf16.msra.mxu0 %v610
      %678 = vmatprep.subr.bf16.mxu0 %v607
      %679 = vmatpush1.bf16.msra.mxu0 %v606
      %680 = vmatprep.subr.bf16.mxu0 %v603
      %681 = vmatpush1.bf16.msra.mxu0 %v602
      %682 = vmatprep.subr.bf16.mxu0 0
      %683 = vmatpush2.bf16.msra.mxu0 0
      %684 = vmatprep.subr.bf16.mxu0 0
      %685 = vmatpush2.bf16.msra.mxu0 0
      %686 = vmatprep.subr.bf16.mxu0 0
      %687 = vmatpush2.bf16.msra.mxu0 0
      %688 = vmatprep.subr.bf16.mxu0 0
      %689 = vmatpush2.bf16.msra.mxu0 0
      %690 = vmatprep.subr.bf16.mxu0 0
      %691 = vmatpush2.bf16.msra.mxu0 0
      %692 = vmatprep.subr.bf16.mxu0 0
      %693 = vmatpush2.bf16.msra.mxu0 0
      %694 = vmatprep.subr.bf16.mxu0 0
      %695 = vmatpush2.bf16.msra.mxu0 0
      %696 = vmatprep.subr.bf16.mxu0 0
      %697 = vmatpush2.bf16.msra.mxu0 0
      %698 = vmatprep.mubr.bf16.mxu0 0
      %699 = vmatmul.mubr.bf16.gmra.mxu0 %v473
      %v700 = vpop.f32.mrf.mxu0
      %v701 = vadd.f32 0.0, %v700
      %v702 = vpop.f32.mrf.mxu0
      %v703 = vadd.f32 0.0, %v702
      %v704 = vpop.f32.mrf.mxu0
      %v705 = vadd.f32 0.0, %v704
      %v706 = vpop.f32.mrf.mxu0
      %v707 = vadd.f32 0.0, %v706
      %708 = vdwg.mxu0
      %709 = vmatprep.subr.bf16.mxu0 %v633
      %710 = vmatpush1.bf16.msra.mxu0 %v632
      %711 = vmatprep.subr.bf16.mxu0 %v629
      %712 = vmatpush1.bf16.msra.mxu0 %v628
      %713 = vmatprep.subr.bf16.mxu0 %v625
      %714 = vmatpush1.bf16.msra.mxu0 %v624
      %715 = vmatprep.subr.bf16.mxu0 %v621
      %716 = vmatpush1.bf16.msra.mxu0 %v620
      %717 = vmatprep.subr.bf16.mxu0 %v617
      %718 = vmatpush1.bf16.msra.mxu0 %v616
      %719 = vmatprep.subr.bf16.mxu0 %v613
      %720 = vmatpush1.bf16.msra.mxu0 %v612
      %721 = vmatprep.subr.bf16.mxu0 %v609
      %722 = vmatpush1.bf16.msra.mxu0 %v608
      %723 = vmatprep.subr.bf16.mxu0 %v605
      %724 = vmatpush1.bf16.msra.mxu0 %v604
      %725 = vmatprep.subr.bf16.mxu0 0
      %726 = vmatpush2.bf16.msra.mxu0 0
      %727 = vmatprep.subr.bf16.mxu0 0
      %728 = vmatpush2.bf16.msra.mxu0 0
      %729 = vmatprep.subr.bf16.mxu0 0
      %730 = vmatpush2.bf16.msra.mxu0 0
      %731 = vmatprep.subr.bf16.mxu0 0
      %732 = vmatpush2.bf16.msra.mxu0 0
      %733 = vmatprep.subr.bf16.mxu0 0
      %734 = vmatpush2.bf16.msra.mxu0 0
      %735 = vmatprep.subr.bf16.mxu0 0
      %736 = vmatpush2.bf16.msra.mxu0 0
      %737 = vmatprep.subr.bf16.mxu0 0
      %738 = vmatpush2.bf16.msra.mxu0 0
      %739 = vmatprep.subr.bf16.mxu0 0
      %740 = vmatpush2.bf16.msra.mxu0 0
      %741 = vmatprep.mubr.bf16.mxu0 0
      %742 = vmatmul.mubr.bf16.gmra.mxu0 %v473
      %v743 = vpop.f32.mrf.mxu0
      %v744 = vadd.f32 0.0, %v743
      %v745 = vpop.f32.mrf.mxu0
      %v746 = vadd.f32 0.0, %v745
      %v747 = vpop.f32.mrf.mxu0
      %v748 = vadd.f32 0.0, %v747
      %v749 = vpop.f32.mrf.mxu0
      %v750 = vadd.f32 0.0, %v749
      %751 = vdwg.mxu0
      %v752 = vmax.f32 %v701, %v705
      %v753 = vrot.slane %v752, 4
      %v754 = vmax.f32 %v752, %v753
      %v755 = vrot.slane %v754, 2
      %v756 = vmax.f32 %v754, %v755
      %v757 = vrot.slane %v756, 1
      %v758 = vmax.f32 %v756, %v757
      %v759 = vmax.f32 %v703, %v707
      %v760 = vrot.slane %v759, 4
      %v761 = vmax.f32 %v759, %v760
      %v762 = vrot.slane %v761, 2
      %v763 = vmax.f32 %v761, %v762
      %v764 = vrot.slane %v763, 1
      %v765 = vmax.f32 %v763, %v764
      %v766 = vmax.f32 %v744, %v748
      %v767 = vrot.slane %v766, 4
      %v768 = vmax.f32 %v766, %v767
      %v769 = vrot.slane %v768, 2
      %v770 = vmax.f32 %v768, %v769
      %v771 = vrot.slane %v770, 1
      %v772 = vmax.f32 %v770, %v771
      %v773 = vmax.f32 %v746, %v750
      %v774 = vrot.slane %v773, 4
      %v775 = vmax.f32 %v773, %v774
      %v776 = vrot.slane %v775, 2
      %v777 = vmax.f32 %v775, %v776
      %v778 = vrot.slane %v777, 1
      %v779 = vmax.f32 %v777, %v778
      %v780 = vld [vmem:[#allocation2] sm:$0xf]
      %v785 = vcombine.low %v758, %v765
      %v786 = vcombine.low %v772, %v779
      %v788 = vunpack.c.l.s4 1966171168
      %v789 = vunpack.c.0.s8 %v788
      %v790 = vlaneseq
      %v791 = vshrl.u32 %v790, 7
      %v792 = vsub.s32 %v789, %v791
      %v793 = vrot.slane %v785, %v792
      %v795 = vunpack.c.l.s4 1966171168
      %v796 = vunpack.c.0.s8 %v795
      %v797 = vlaneseq
      %v798 = vshrl.u32 %v797, 7
      %v799 = vsub.s32 %v796, %v798
      %v800 = vrot.slane %v786, %v799
      %v801 = vcombine.low %v793, %v800
      %v803 = vunpack.c.l.s4 1966171168
      %v804 = vunpack.c.0.s8 %v803
      %v805 = vlaneseq
      %v806 = vshrl.u32 %v805, 7
      %v807 = vsub.s32 %v804, %v806
      %v808 = vrot.slane %v801, %v807
      %v810 = vmax.f32 %v780, %v808
      %v811 = vlaneseq
      %vm812 = vcmp.ge.s32.totalorder %v811, 0
      %vm813 = vcmp.lt.s32.totalorder %v811, 512
      %vm814 = vmand %vm812, %vm813
      %815 = vst.msk [vmem:[#allocation2] sm:$0xf] %vm814, %v810
      // Predicated region
      $region53: #{pointnet_cmap_encoder.1} parent=47 // pred_check
        %p816 = pneg %p299
      $region54: #{pointnet_cmap_encoder.1} parent=47 // pred_check_branch
        %818 = sbr.rel (%p816) target = $region56
      $region55: #{pointnet_cmap_encoder.1} parent=47 // pred_region
        %v819 = vld [vmem:[#allocation2] sm:$0xf]
        %v820 = vld [vmem:[%s6] sm:$0xf]
        %v821 = vadd.f32 %v819, %v820
        %822 = vst.msk [vmem:[%s297] sm:$0xf] %vm814, %v821
      $region56: #{pointnet_cmap_encoder.1} parent=47 // pred_fallthru
        _
      %p823 = scmp.lt.s32.totalorder %s22, 1
      %s824 = scalar_select %p823, %s22, 1
      %s825 = smul.addr %s824, 4
      %s826 = scalar_lea.vmem %s7, %s825
      // Predicated region
      $region57: #{pointnet_cmap_encoder.1} parent=47 // pred_check
        %p827 = pneg %p202
      $region58: #{pointnet_cmap_encoder.1} parent=47 // pred_check_branch
        %829 = sbr.rel (%p827) target = $region60
      $region59: #{pointnet_cmap_encoder.1} parent=47 // pred_region
        _
      $region60: #{pointnet_cmap_encoder.1} parent=47 // pred_fallthru
        _
    $region48: #{pointnet_cmap_encoder.1} parent=5 // pred_fallthru
      _
    %p830 = scmp.le.s32.totalorder 2, %s13
    // Predicated region
    $region61: #{pointnet_cmap_encoder.1} parent=5 // pred_check
      %p831 = pneg %p830
    $region62: #{pointnet_cmap_encoder.1} parent=5 // pred_check_branch
      %833 = sbr.rel (%p831) target = $region64
    $region63: #{pointnet_cmap_encoder.1} parent=5 // pred_region
      %s834 = ssub.s32 %s13, 2
      // Predicated region
      $region65: #{pointnet_cmap_encoder.1} parent=63 // pred_check
        %p835 = pneg %p208
      $region66: #{pointnet_cmap_encoder.1} parent=63 // pred_check_branch
        %837 = sbr.rel (%p835) target = $region68
      $region67: #{pointnet_cmap_encoder.1} parent=63 // pred_region
        %p838 = scmp.lt.s32.totalorder %s24, 1
        %s839 = scalar_select %p838, %s24, 1
        %s840 = smul.addr %s839, 4
        %s841 = scalar_lea.vmem %s7, %s840
      $region68: #{pointnet_cmap_encoder.1} parent=63 // pred_fallthru
        _
    $region64: #{pointnet_cmap_encoder.1} parent=5 // pred_fallthru
      _
  $region6: #{pointnet_cmap_encoder.1} parent=0 // loop_footer
    %s17 = sadd.s32 1, %s13
  $region7: #{pointnet_cmap_encoder.1} parent=0 // loop_footer_branch
    %12 = sbr.rel target = $region3
  $region8: #{pointnet_cmap_encoder.1} parent=0 // loop_exit
    _

</llo_original>
